<compile_context>
chip_gen: v7x
topology: tpu7x:2x2x1
jax: 0.10.0
libtpu: 0.0.40
codegen_flags: <defaults>
</compile_context>

<pallas_src>
import functools

import jax
import jax.numpy as jnp
from jax.experimental import pallas as pl
from jax.experimental.pallas import tpu as pltpu

LANE = 128


def _round_up(n, m):
    return ((n + m - 1) // m) * m


def _vmem_capacity_bytes():
    try:
        return int(pltpu.get_tpu_info().vmem_capacity_bytes)
    except Exception:
        return 64 << 20  # conservative fallback (v7x per-core VMEM)


def _vmem_cap():
    cap_total = _vmem_capacity_bytes()
    # Leave headroom for Mosaic internal scratch:
    #   v7x (64 MiB)      -> ~40 MiB usable cap
    #   v5e/v6e (128 MiB) -> ~100 MiB usable cap
    return max(min(int(cap_total * 0.78), cap_total - (24 << 20)), 32 << 20)


def _pad_cast(a, shape, dtype):
    out = jnp.zeros(shape, dtype)
    return out.at[tuple(slice(0, s) for s in a.shape)].set(a.astype(dtype))


# ---------------------------------------------------------------------------
# Fully VMEM-resident fused kernel (small / medium graphs).
# ---------------------------------------------------------------------------
def _fused_gcn_kernel(x_ref, adj_ref, w1_ref, b1_ref, w2_ref, b2_ref, o_ref):
    adj = adj_ref[...]
    # layer 1: h1 = relu(adj @ (x @ W1 + b1))
    z1 = jnp.dot(x_ref[...], w1_ref[...], preferred_element_type=jnp.float32)
    z1 = z1 + b1_ref[...]
    h1 = jnp.dot(adj, z1.astype(jnp.bfloat16),
                 preferred_element_type=jnp.float32)
    h1 = jnp.maximum(h1, 0.0)
    # TODO(synk): nn.Dropout is identity in eval mode; training-mode masking
    # would use pltpu.prng_seed / pltpu.prng_random_bits on h1.
    # layer 2: out = adj @ (h1 @ W2 + b2)   (h1 stays live, no scratch trip)
    z2 = jnp.dot(h1.astype(jnp.bfloat16), w2_ref[...],
                 preferred_element_type=jnp.float32)
    z2 = z2 + b2_ref[...]
    o_ref[...] = jnp.dot(adj, z2.astype(jnp.bfloat16),
                         preferred_element_type=jnp.float32).astype(o_ref.dtype)


def _fused_forward(x_p, prep, vmem_limit):
    n_p = x_p.shape[0]
    f_p, h_p = prep["w1"].shape
    c_p = prep["w2"].shape[1]
    flops = 2 * (n_p * f_p * h_p + n_p * n_p * h_p
                 + n_p * h_p * c_p + n_p * n_p * c_p)
    in_bytes = ((x_p.size + prep["adj"].size + prep["w1"].size
                 + prep["w2"].size) * 2
                + (prep["b1"].size + prep["b2"].size) * 4)
    out_bytes = n_p * c_p * 4
    vmem_spec = pl.BlockSpec(memory_space=pltpu.MemorySpace.VMEM)
    return pl.pallas_call(
        _fused_gcn_kernel,
        out_shape=jax.ShapeDtypeStruct((n_p, c_p), jnp.float32),
        in_specs=[vmem_spec] * 6,
        out_specs=vmem_spec,
        compiler_params=pltpu.CompilerParams(vmem_limit_bytes=int(vmem_limit)),
        cost_estimate=pl.CostEstimate(flops=flops, transcendentals=0,
                                      bytes_accessed=in_bytes + out_bytes),
    )(x_p, prep["adj"], prep["w1"], prep["b1"], prep["w2"], prep["b2"])


# ---------------------------------------------------------------------------
# Row-tiled two-phase path (graphs too large for a fully resident adj).
# ---------------------------------------------------------------------------
def _linear_kernel(x_ref, w_ref, b_ref, z_ref):
    z = jnp.dot(x_ref[...], w_ref[...], preferred_element_type=jnp.float32)
    z_ref[...] = (z + b_ref[...]).astype(z_ref.dtype)


def _aggregate_kernel(adj_ref, z_ref, o_ref, *, relu):
    out = jnp.dot(adj_ref[...], z_ref[...], preferred_element_type=jnp.float32)
    if relu:
        out = jnp.maximum(out, 0.0)
    o_ref[...] = out.astype(o_ref.dtype)


def _pick_tile(n_p):
    # v6e / v7x MXU is 256x256 -> prefer >=256 row tiles when they divide N_p.
    for t in (512, 256, 128):
        if n_p % t == 0:
            return t
    return n_p


def _linear(x_p, w_p, b_p, out_dtype, vmem_limit):
    n_p, f_p = x_p.shape
    d = w_p.shape[1]
    tm = _pick_tile(n_p)
    return pl.pallas_call(
        _linear_kernel,
        out_shape=jax.ShapeDtypeStruct((n_p, d), out_dtype),
        grid=(n_p // tm,),
        in_specs=[pl.BlockSpec((tm, f_p), lambda i: (i, 0)),
                  pl.BlockSpec((f_p, d), lambda i: (0, 0)),
                  pl.BlockSpec((1, d), lambda i: (0, 0))],
        out_specs=pl.BlockSpec((tm, d), lambda i: (i, 0)),
        compiler_params=pltpu.CompilerParams(
            dimension_semantics=("parallel",),
            vmem_limit_bytes=int(vmem_limit)),
    )(x_p, w_p, b_p)


def _aggregate(adj_p, z_p, out_dtype, relu, vmem_limit):
    n_p = adj_p.shape[0]
    d = z_p.shape[1]
    tm = _pick_tile(n_p)
    return pl.pallas_call(
        functools.partial(_aggregate_kernel, relu=relu),
        out_shape=jax.ShapeDtypeStruct((n_p, d), out_dtype),
        grid=(n_p // tm,),
        in_specs=[pl.BlockSpec((tm, n_p), lambda i: (i, 0)),
                  pl.BlockSpec((n_p, d), lambda i: (0, 0))],
        out_specs=pl.BlockSpec((tm, d), lambda i: (i, 0)),
        compiler_params=pltpu.CompilerParams(
            dimension_semantics=("parallel",),
            vmem_limit_bytes=int(vmem_limit)),
    )(adj_p, z_p)


def _tiled_forward(x_p, prep, vmem_limit):
    # TODO(synk): z1/z2 are still fully resident per aggregate call; graphs
    # where even N_p x H_p bf16 exceeds VMEM would also need a K-tiled
    # accumulator over the contraction axis.
    z1 = _linear(x_p, prep["w1"], prep["b1"], jnp.bfloat16, vmem_limit)
    h1 = _aggregate(prep["adj"], z1, jnp.bfloat16, True, vmem_limit)
    # dropout: identity in eval mode.
    z2 = _linear(h1, prep["w2"], prep["b2"], jnp.bfloat16, vmem_limit)
    return _aggregate(prep["adj"], z2, jnp.float32, False, vmem_limit)


# ---------------------------------------------------------------------------
# Wrapper API
# ---------------------------------------------------------------------------
def prepare_gcn(params, adj):
    """One-time pad + bf16 cast of the graph adjacency and the weights."""
    n = adj.shape[0]
    f_in, hidden = params["w1"].shape
    num_classes = params["w2"].shape[1]
    n_p = _round_up(n, LANE)
    f_p = _round_up(f_in, LANE)
    h_p = _round_up(hidden, LANE)
    c_p = _round_up(num_classes, LANE)
    bf16 = jnp.bfloat16
    return {
        "adj": _pad_cast(adj, (n_p, n_p), bf16),
        "w1": _pad_cast(params["w1"], (f_p, h_p), bf16),
        "w2": _pad_cast(params["w2"], (h_p, c_p), bf16),
        "b1": _pad_cast(params["b1"], (1, h_p), jnp.float32),
        "b2": _pad_cast(params["b2"], (1, c_p), jnp.float32),
        "dims": (n, f_in, hidden, num_classes),
    }


def gcn_forward(x, prep, force_tiled=False):
    """2-layer GCN forward.  x: [N, F] f32;  prep: output of prepare_gcn."""
    n, f_in, hidden, num_classes = prep["dims"]
    n_p = prep["adj"].shape[0]
    f_p, h_p = prep["w1"].shape
    c_p = prep["w2"].shape[1]

    x_p = _pad_cast(x, (n_p, f_p), jnp.bfloat16)  # only x is padded per call

    cap = _vmem_cap()
    # Single-buffered residency estimate for the fused kernel.
    resident = ((prep["adj"].size + x_p.size + prep["w1"].size
                 + prep["w2"].size) * 2
                + (prep["b1"].size + prep["b2"].size) * 4
                + n_p * c_p * 4)                      # f32 output
    resident += 2 * n_p * h_p * 4 + n_p * c_p * 4     # live f32 intermediates
    fused_fits = resident <= int(cap * 0.9)

    if fused_fits and not force_tiled:
        vmem_limit = min(max(int(resident * 1.25), 16 << 20), cap)
        out_p = _fused_forward(x_p, prep, vmem_limit)
    else:
        out_p = _tiled_forward(x_p, prep, cap)

    # Strip padding (padded rows/cols contribute exactly zero).
    return out_p[:n, :num_classes]


def xavier_uniform(key, fan_in, fan_out):
    bound = (6.0 / (fan_in + fan_out)) ** 0.5
    return jax.random.uniform(
        key, (fan_in, fan_out), minval=-bound, maxval=bound, dtype=jnp.float32
    )


def init_gcn_params(key, node_features, hidden_dim, num_classes):
    k1, k2 = jax.random.split(key)
    return {
        "w1": xavier_uniform(k1, node_features, hidden_dim),
        "b1": jnp.zeros((1, hidden_dim), jnp.float32),
        "w2": xavier_uniform(k2, hidden_dim, num_classes),
        "b2": jnp.zeros((1, num_classes), jnp.float32),
    }


if __name__ == "__main__":
    # Small synthetic problem: 16 nodes, 32 input features, 64 hidden, 8 classes.
    N, F_IN, HIDDEN, NUM_CLASSES = 16, 32, 64, 8

    key = jax.random.PRNGKey(0)
    k_x, k_adj, k_params = jax.random.split(key, 3)

    x = jax.random.normal(k_x, (N, F_IN), dtype=jnp.float32)

    # Symmetric, self-looped, row-normalized dense adjacency (GCN-style).
    a = (jax.random.uniform(k_adj, (N, N)) > 0.7).astype(jnp.float32)
    a = jnp.maximum(a, a.T) + jnp.eye(N, dtype=jnp.float32)
    adj = a / jnp.sum(a, axis=1, keepdims=True)

    params = init_gcn_params(k_params, F_IN, HIDDEN, NUM_CLASSES)

    prep = prepare_gcn(params, adj)  # one-time pad/cast (hoisted out of forward)

    out = jax.block_until_ready(gcn_forward(x, prep))                    # fused path
    out_tiled = jax.block_until_ready(gcn_forward(x, prep, force_tiled=True))  # tiled path
    assert out.shape == (N, NUM_CLASSES)
    assert out_tiled.shape == (N, NUM_CLASSES)

    # Pure-JAX reference applying the SAME bf16 operand casts / f32 accumulation
    # as the kernels (zero padding is exact, so no padding needed here).
    bf16 = jnp.bfloat16
    f32dot = functools.partial(jnp.dot, preferred_element_type=jnp.float32)
    z1 = f32dot(x.astype(bf16), params["w1"].astype(bf16)) + params["b1"]
    h1 = jnp.maximum(f32dot(adj.astype(bf16), z1.astype(bf16)), 0.0)
    z2 = f32dot(h1.astype(bf16), params["w2"].astype(bf16)) + params["b2"]
    out_ref = f32dot(adj.astype(bf16), z2.astype(bf16))

    assert jnp.allclose(out, out_ref, atol=1e-3, rtol=1e-3)
    assert jnp.allclose(out_tiled, out_ref, atol=1e-3, rtol=1e-3)

    print("KERNEL_OK")
</pallas_src>

<mosaic_0001>
module attributes {stable_mosaic.version = 11 : i64} {
  func.func @_fused_gcn_kernel(%arg0: memref<128x128xbf16, #tpu.memory_space<vmem>>, %arg1: memref<128x128xbf16, #tpu.memory_space<vmem>>, %arg2: memref<128x128xbf16, #tpu.memory_space<vmem>>, %arg3: memref<1x128xf32, #tpu.memory_space<vmem>>, %arg4: memref<128x128xbf16, #tpu.memory_space<vmem>>, %arg5: memref<1x128xf32, #tpu.memory_space<vmem>>, %arg6: memref<128x128xf32, #tpu.memory_space<vmem>>) attributes {dimension_semantics = [], scalar_prefetch = 0 : i64, scratch_operands = 0 : i64, tpu.core_type = #tpu.core_type<tc>} {
    %c0 = arith.constant 0 : index
    %c0_0 = arith.constant 0 : index
    %0 = vector.load %arg1[%c0, %c0_0] : memref<128x128xbf16, #tpu.memory_space<vmem>>, vector<128x128xbf16>
    %c0_1 = arith.constant 0 : index
    %c0_2 = arith.constant 0 : index
    %1 = vector.load %arg0[%c0_1, %c0_2] : memref<128x128xbf16, #tpu.memory_space<vmem>>, vector<128x128xbf16>
    %c0_3 = arith.constant 0 : index
    %c0_4 = arith.constant 0 : index
    %2 = vector.load %arg2[%c0_3, %c0_4] : memref<128x128xbf16, #tpu.memory_space<vmem>>, vector<128x128xbf16>
    %cst = arith.constant dense<0.000000e+00> : vector<128x128xf32>
    %3 = tpu.matmul %1, %2, %cst {dimension_numbers = #tpu.dot_dimension_numbers<[1], [0], [0], [1], [0, 0, 1, 1], [], []>} : vector<128x128xbf16>, vector<128x128xbf16>, vector<128x128xf32> -> vector<128x128xf32>
    %c0_5 = arith.constant 0 : index
    %c0_6 = arith.constant 0 : index
    %4 = vector.load %arg3[%c0_5, %c0_6] : memref<1x128xf32, #tpu.memory_space<vmem>>, vector<1x128xf32>
    %5 = vector.broadcast %4 : vector<1x128xf32> to vector<128x128xf32>
    %6 = arith.addf %3, %5 : vector<128x128xf32>
    %7 = arith.truncf %6 : vector<128x128xf32> to vector<128x128xbf16>
    %cst_7 = arith.constant dense<0.000000e+00> : vector<128x128xf32>
    %8 = tpu.matmul %0, %7, %cst_7 {dimension_numbers = #tpu.dot_dimension_numbers<[1], [0], [0], [1], [0, 0, 1, 1], [], []>} : vector<128x128xbf16>, vector<128x128xbf16>, vector<128x128xf32> -> vector<128x128xf32>
    %cst_8 = arith.constant 0.000000e+00 : f32
    %9 = vector.broadcast %cst_8 : f32 to vector<128x128xf32>
    %10 = arith.maximumf %8, %9 : vector<128x128xf32>
    %11 = arith.truncf %10 : vector<128x128xf32> to vector<128x128xbf16>
    %c0_9 = arith.constant 0 : index
    %c0_10 = arith.constant 0 : index
    %12 = vector.load %arg4[%c0_9, %c0_10] : memref<128x128xbf16, #tpu.memory_space<vmem>>, vector<128x128xbf16>
    %cst_11 = arith.constant dense<0.000000e+00> : vector<128x128xf32>
    %13 = tpu.matmul %11, %12, %cst_11 {dimension_numbers = #tpu.dot_dimension_numbers<[1], [0], [0], [1], [0, 0, 1, 1], [], []>} : vector<128x128xbf16>, vector<128x128xbf16>, vector<128x128xf32> -> vector<128x128xf32>
    %c0_12 = arith.constant 0 : index
    %c0_13 = arith.constant 0 : index
    %14 = vector.load %arg5[%c0_12, %c0_13] : memref<1x128xf32, #tpu.memory_space<vmem>>, vector<1x128xf32>
    %15 = vector.broadcast %14 : vector<1x128xf32> to vector<128x128xf32>
    %16 = arith.addf %13, %15 : vector<128x128xf32>
    %17 = arith.truncf %16 : vector<128x128xf32> to vector<128x128xbf16>
    %cst_14 = arith.constant dense<0.000000e+00> : vector<128x128xf32>
    %18 = tpu.matmul %0, %17, %cst_14 {dimension_numbers = #tpu.dot_dimension_numbers<[1], [0], [0], [1], [0, 0, 1, 1], [], []>} : vector<128x128xbf16>, vector<128x128xbf16>, vector<128x128xf32> -> vector<128x128xf32>
    %c0_15 = arith.constant 0 : index
    %c0_16 = arith.constant 0 : index
    %19 = vector.load %arg6[%c0_15, %c0_16] : memref<128x128xf32, #tpu.memory_space<vmem>>, vector<128x128xf32>
    tpu.vector_store %arg6[%c0_15, %c0_16], %18 {strides = array<i32>} : memref<128x128xf32, #tpu.memory_space<vmem>>, vector<128x128xf32>,
    return
  }
}

</mosaic_0001>

<llo_original>
// kernel: tpu_custom_call.1
$region0: #{tpu_custom_call.1}
  #allocation0 [shape = 'u32[]', space=smem, size = 0x4, offset = 0x4, fixed_abs, tag = 'smem constant byte address 0x4 - core index']
  #allocation1 [shape = 'u32[144,128]{1,0:T(1,128)}', space=vmem, size = 0x12000, scoped, tag = 'internal scratch']
  %s0 = inlined_call_operand.hbm [shape: bf16[128,128], index: 0, kind: input, shape index: {}]
  %s1 = inlined_call_operand.hbm [shape: bf16[128,128], index: 1, kind: input, shape index: {}]
  %s2 = inlined_call_operand.hbm [shape: bf16[128,128], index: 2, kind: input, shape index: {}]
  %s3 = inlined_call_operand.vmem [shape: f32[1,128], index: 3, kind: input, shape index: {}]
  %s4 = inlined_call_operand.hbm [shape: bf16[128,128], index: 4, kind: input, shape index: {}]
  %s5 = inlined_call_operand.vmem [shape: f32[1,128], index: 5, kind: input, shape index: {}]
  %s6 = inlined_call_operand.hbm [shape: f32[128,128], index: 6, kind: output, shape index: {}]
  %s7 = sld [smem:[#allocation0]]
  $region50: #{tpu_custom_call.1} parent=0
    _
  %s9 = ssub.s32 1, %s7
  %s10 = scalar_select 0, %s9, %s7
  $region1: #{tpu_custom_call.1} parent=0
    #allocation2 [shape = 'u8[32768]{0}', space=vmem, size = 0x8000, scoped, tag = 'input window, operand 0, single buffered']
    #allocation3 [shape = 's32[1]{0}', space=sflag, size = 0x4, scoped, tag = 'scoped memory for tpu_custom_call.1']
    #allocation4 [shape = 's32[1]{0}', space=sflag, size = 0x4, scoped, tag = 'scoped memory for tpu_custom_call.1']
    #allocation5 [shape = 'u8[32768]{0}', space=vmem, size = 0x8000, scoped, tag = 'input window, operand 1, single buffered']
    #allocation6 [shape = 's32[1]{0}', space=sflag, size = 0x4, scoped, tag = 'scoped memory for tpu_custom_call.1']
    #allocation7 [shape = 'u8[32768]{0}', space=vmem, size = 0x8000, scoped, tag = 'input window, operand 2, single buffered']
    #allocation8 [shape = 'u8[32768]{0}', space=vmem, size = 0x8000, scoped, tag = 'input window, operand 4, single buffered']
    #allocation9 [shape = 's32[1]{0}', space=sflag, size = 0x4, scoped, tag = 'scoped memory for tpu_custom_call.1']
    #allocation10 [shape = 'u8[65536]{0}', space=vmem, size = 0x10000, scoped, tag = 'output window, operand 0, single buffered']
    %11 = vsyncpa [#allocation3], 0
    %12 = vsyncpa [#allocation6], 0
    %13 = vsyncpa [#allocation9], 0
    %14 = vsyncpa [#allocation4], 0
    // Predicated region
    $region2: #{tpu_custom_call.1} parent=1 // pred_check
      _
    $region3: #{tpu_custom_call.1} parent=1 // pred_check_branch
      %16 = sbr.rel (0) target = $region5
    $region4: #{tpu_custom_call.1} parent=1 // pred_region
      %s18 = ssub.s32 1024, 1024
      %19 = vsyncadd [#allocation3], %s18
      %s20 = sshll.u32 [#allocation2], 4
      %s21 = int_to_ptr.vmem [resolvable:$true] %s20
      %26 = dma.hbm_to_vmem [thread:$0]  %s0, 1024, %s21, [#allocation3], 64, 64, 4
    $region5: #{tpu_custom_call.1} parent=1 // pred_fallthru
      _
    // Predicated region
    $region6: #{tpu_custom_call.1} parent=1 // pred_check
      _
    $region7: #{tpu_custom_call.1} parent=1 // pred_check_branch
      %28 = sbr.rel (0) target = $region9
    $region8: #{tpu_custom_call.1} parent=1 // pred_region
      %s30 = ssub.s32 1024, 1024
      %31 = vsyncadd [#allocation6], %s30
      %s32 = sshll.u32 [#allocation5], 4
      %s33 = int_to_ptr.vmem [resolvable:$true] %s32
      %38 = dma.hbm_to_vmem [thread:$0]  %s1, 1024, %s33, [#allocation6], 64, 64, 4
    $region9: #{tpu_custom_call.1} parent=1 // pred_fallthru
      _
    // Predicated region
    $region10: #{tpu_custom_call.1} parent=1 // pred_check
      _
    $region11: #{tpu_custom_call.1} parent=1 // pred_check_branch
      %40 = sbr.rel (0) target = $region13
    $region12: #{tpu_custom_call.1} parent=1 // pred_region
      %s42 = ssub.s32 1024, 1024
      %43 = vsyncadd [#allocation6], %s42
      %s44 = sshll.u32 [#allocation7], 4
      %s45 = int_to_ptr.vmem [resolvable:$true] %s44
      %50 = dma.hbm_to_vmem [thread:$0]  %s2, 1024, %s45, [#allocation6], 64, 64, 4
    $region13: #{tpu_custom_call.1} parent=1 // pred_fallthru
      _
    // Predicated region
    $region14: #{tpu_custom_call.1} parent=1 // pred_check
      _
    $region15: #{tpu_custom_call.1} parent=1 // pred_check_branch
      %52 = sbr.rel (0) target = $region17
    $region16: #{tpu_custom_call.1} parent=1 // pred_region
      _
    $region17: #{tpu_custom_call.1} parent=1 // pred_fallthru
      _
    // Predicated region
    $region18: #{tpu_custom_call.1} parent=1 // pred_check
      _
    $region19: #{tpu_custom_call.1} parent=1 // pred_check_branch
      %54 = sbr.rel (0) target = $region21
    $region20: #{tpu_custom_call.1} parent=1 // pred_region
      %s56 = ssub.s32 1024, 1024
      %57 = vsyncadd [#allocation9], %s56
      %s58 = sshll.u32 [#allocation8], 4
      %s59 = int_to_ptr.vmem [resolvable:$true] %s58
      %64 = dma.hbm_to_vmem [thread:$0]  %s4, 1024, %s59, [#allocation9], 64, 64, 4
    $region21: #{tpu_custom_call.1} parent=1 // pred_fallthru
      _
    // Predicated region
    $region22: #{tpu_custom_call.1} parent=1 // pred_check
      _
    $region23: #{tpu_custom_call.1} parent=1 // pred_check_branch
      %66 = sbr.rel (0) target = $region25
    $region24: #{tpu_custom_call.1} parent=1 // pred_region
      _
    $region25: #{tpu_custom_call.1} parent=1 // pred_fallthru
      _
    // Predicated region
    $region26: #{tpu_custom_call.1} parent=1 // pred_check
      _
    $region27: #{tpu_custom_call.1} parent=1 // pred_check_branch
      %68 = sbr.rel (0) target = $region29
    $region28: #{tpu_custom_call.1} parent=1 // pred_region
      %69 = dma.done [#allocation3], 1024
    $region29: #{tpu_custom_call.1} parent=1 // pred_fallthru
      _
    // Predicated region
    $region30: #{tpu_custom_call.1} parent=1 // pred_check
      _
    $region31: #{tpu_custom_call.1} parent=1 // pred_check_branch
      %71 = sbr.rel (0) target = $region33
    $region32: #{tpu_custom_call.1} parent=1 // pred_region
      %72 = dma.done [#allocation6], 1024
    $region33: #{tpu_custom_call.1} parent=1 // pred_fallthru
      _
    // Predicated region
    $region34: #{tpu_custom_call.1} parent=1 // pred_check
      _
    $region35: #{tpu_custom_call.1} parent=1 // pred_check_branch
      %74 = sbr.rel (0) target = $region37
    $region36: #{tpu_custom_call.1} parent=1 // pred_region
      %75 = dma.done [#allocation6], 1024
    $region37: #{tpu_custom_call.1} parent=1 // pred_fallthru
      _
    // Predicated region
    $region38: #{tpu_custom_call.1} parent=1 // pred_check
      _
    $region39: #{tpu_custom_call.1} parent=1 // pred_check_branch
      %77 = sbr.rel (0) target = $region41
    $region40: #{tpu_custom_call.1} parent=1 // pred_region
      %78 = dma.done [#allocation9], 1024
    $region41: #{tpu_custom_call.1} parent=1 // pred_fallthru
      _
    %v80 = vld [vmem:[#allocation5] sm:$0xf]
    %v81 = vld [vmem:[#allocation5 + $0x4] sm:$0xf]
    %v82 = vld [vmem:[#allocation5 + $0x8] sm:$0xf]
    %v83 = vld [vmem:[#allocation5 + $0xc] sm:$0xf]
    %v84 = vld [vmem:[#allocation5 + $0x10] sm:$0xf]
    %v85 = vld [vmem:[#allocation5 + $0x14] sm:$0xf]
    %v86 = vld [vmem:[#allocation5 + $0x18] sm:$0xf]
    %v87 = vld [vmem:[#allocation5 + $0x1c] sm:$0xf]
    %v88 = vld [vmem:[#allocation5 + $0x20] sm:$0xf]
    %v89 = vld [vmem:[#allocation5 + $0x24] sm:$0xf]
    %v90 = vld [vmem:[#allocation5 + $0x28] sm:$0xf]
    %v91 = vld [vmem:[#allocation5 + $0x2c] sm:$0xf]
    %v92 = vld [vmem:[#allocation5 + $0x30] sm:$0xf]
    %v93 = vld [vmem:[#allocation5 + $0x34] sm:$0xf]
    %v94 = vld [vmem:[#allocation5 + $0x38] sm:$0xf]
    %v95 = vld [vmem:[#allocation5 + $0x3c] sm:$0xf]
    %v96 = vld [vmem:[#allocation2] sm:$0xf]
    %v97 = vld [vmem:[#allocation2 + $0x4] sm:$0xf]
    %v98 = vld [vmem:[#allocation2 + $0x8] sm:$0xf]
    %v99 = vld [vmem:[#allocation2 + $0xc] sm:$0xf]
    %v100 = vld [vmem:[#allocation2 + $0x10] sm:$0xf]
    %v101 = vld [vmem:[#allocation2 + $0x14] sm:$0xf]
    %v102 = vld [vmem:[#allocation2 + $0x18] sm:$0xf]
    %v103 = vld [vmem:[#allocation2 + $0x1c] sm:$0xf]
    %v104 = vld [vmem:[#allocation2 + $0x20] sm:$0xf]
    %v105 = vld [vmem:[#allocation2 + $0x24] sm:$0xf]
    %v106 = vld [vmem:[#allocation2 + $0x28] sm:$0xf]
    %v107 = vld [vmem:[#allocation2 + $0x2c] sm:$0xf]
    %v108 = vld [vmem:[#allocation2 + $0x30] sm:$0xf]
    %v109 = vld [vmem:[#allocation2 + $0x34] sm:$0xf]
    %v110 = vld [vmem:[#allocation2 + $0x38] sm:$0xf]
    %v111 = vld [vmem:[#allocation2 + $0x3c] sm:$0xf]
    %v112 = vld [vmem:[#allocation7] sm:$0xf]
    %v113 = vld [vmem:[#allocation7 + $0x4] sm:$0xf]
    %v114 = vld [vmem:[#allocation7 + $0x8] sm:$0xf]
    %v115 = vld [vmem:[#allocation7 + $0xc] sm:$0xf]
    %v116 = vld [vmem:[#allocation7 + $0x10] sm:$0xf]
    %v117 = vld [vmem:[#allocation7 + $0x14] sm:$0xf]
    %v118 = vld [vmem:[#allocation7 + $0x18] sm:$0xf]
    %v119 = vld [vmem:[#allocation7 + $0x1c] sm:$0xf]
    %v120 = vld [vmem:[#allocation7 + $0x20] sm:$0xf]
    %v121 = vld [vmem:[#allocation7 + $0x24] sm:$0xf]
    %v122 = vld [vmem:[#allocation7 + $0x28] sm:$0xf]
    %v123 = vld [vmem:[#allocation7 + $0x2c] sm:$0xf]
    %v124 = vld [vmem:[#allocation7 + $0x30] sm:$0xf]
    %v125 = vld [vmem:[#allocation7 + $0x34] sm:$0xf]
    %v126 = vld [vmem:[#allocation7 + $0x38] sm:$0xf]
    %v127 = vld [vmem:[#allocation7 + $0x3c] sm:$0xf]
    %v128 = vld [vmem:[%s3] sm:$0x1]
    %v130 = vlaneseq
    %v131 = vshrl.u32 %v130, 7
    %v132 = vsub.s32 0, %v131
    %v133 = vrot.slane %v128, %v132
    %v151 = vunpack.c.l.b16 %v96
    %v152 = vunpack.c.l.b16 %v97
    %v153 = vunpack.c.l.b16 %v98
    %v154 = vunpack.c.l.b16 %v99
    %v155 = vunpack.c.l.b16 %v100
    %v156 = vunpack.c.l.b16 %v101
    %v157 = vunpack.c.l.b16 %v102
    %v158 = vunpack.c.l.b16 %v103
    %v159 = vunpack.c.l.b16 %v104
    %v160 = vunpack.c.l.b16 %v105
    %v161 = vunpack.c.l.b16 %v106
    %v162 = vunpack.c.l.b16 %v107
    %v163 = vunpack.c.l.b16 %v108
    %v164 = vunpack.c.l.b16 %v109
    %v165 = vunpack.c.l.b16 %v110
    %v166 = vunpack.c.l.b16 %v111
    %v167 = vpack.c.b16 %v152, %v151
    %v168 = vpack.c.b16 %v154, %v153
    %v169 = vpack.c.b16 %v156, %v155
    %v170 = vpack.c.b16 %v158, %v157
    %v171 = vpack.c.b16 %v160, %v159
    %v172 = vpack.c.b16 %v162, %v161
    %v173 = vpack.c.b16 %v164, %v163
    %v174 = vpack.c.b16 %v166, %v165
    %v199 = vunpack.c.l.b16 %v112
    %v200 = vunpack.c.l.b16 %v113
    %v201 = vunpack.c.l.b16 %v114
    %v202 = vunpack.c.l.b16 %v115
    %v203 = vunpack.c.l.b16 %v116
    %v204 = vunpack.c.l.b16 %v117
    %v205 = vunpack.c.l.b16 %v118
    %v206 = vunpack.c.l.b16 %v119
    %v207 = vunpack.c.l.b16 %v120
    %v208 = vunpack.c.l.b16 %v121
    %v209 = vunpack.c.l.b16 %v122
    %v210 = vunpack.c.l.b16 %v123
    %v211 = vunpack.c.l.b16 %v124
    %v212 = vunpack.c.l.b16 %v125
    %v213 = vunpack.c.l.b16 %v126
    %v214 = vunpack.c.l.b16 %v127
    %v215 = vpack.c.b16 %v200, %v199
    %v216 = vpack.c.b16 %v202, %v201
    %v217 = vpack.c.b16 %v204, %v203
    %v218 = vpack.c.b16 %v206, %v205
    %v219 = vpack.c.b16 %v208, %v207
    %v220 = vpack.c.b16 %v210, %v209
    %v221 = vpack.c.b16 %v212, %v211
    %v222 = vpack.c.b16 %v214, %v213
    %231 = vmatprep.subr.bf16.mxu0 0
    %232 = vmatpush1.bf16.msra.mxu0 %v215
    %233 = vmatprep.subr.bf16.mxu0 0
    %234 = vmatpush1.bf16.msra.mxu0 %v216
    %235 = vmatprep.subr.bf16.mxu0 0
    %236 = vmatpush1.bf16.msra.mxu0 %v217
    %237 = vmatprep.subr.bf16.mxu0 0
    %238 = vmatpush1.bf16.msra.mxu0 %v218
    %239 = vmatprep.subr.bf16.mxu0 0
    %240 = vmatpush1.bf16.msra.mxu0 %v219
    %241 = vmatprep.subr.bf16.mxu0 0
    %242 = vmatpush1.bf16.msra.mxu0 %v220
    %243 = vmatprep.subr.bf16.mxu0 0
    %244 = vmatpush1.bf16.msra.mxu0 %v221
    %245 = vmatprep.subr.bf16.mxu0 0
    %246 = vmatpush1.bf16.msra.mxu0 %v222
    %247 = vmatprep.subr.bf16.mxu0 0
    %248 = vmatpush1.bf16.msra.mxu0 0
    %249 = vmatprep.subr.bf16.mxu0 0
    %250 = vmatpush1.bf16.msra.mxu0 0
    %251 = vmatprep.subr.bf16.mxu0 0
    %252 = vmatpush1.bf16.msra.mxu0 0
    %253 = vmatprep.subr.bf16.mxu0 0
    %254 = vmatpush1.bf16.msra.mxu0 0
    %255 = vmatprep.subr.bf16.mxu0 0
    %256 = vmatpush1.bf16.msra.mxu0 0
    %257 = vmatprep.subr.bf16.mxu0 0
    %258 = vmatpush1.bf16.msra.mxu0 0
    %259 = vmatprep.subr.bf16.mxu0 0
    %260 = vmatpush1.bf16.msra.mxu0 0
    %261 = vmatprep.subr.bf16.mxu0 0
    %262 = vmatpush1.bf16.msra.mxu0 0
    %263 = vmatprep.mubr.bf16.mxu0 0
    %264 = vmatmul.mubr.bf16.gmra.mrb[0].mxu0 %v167
    %v265 = vpop.f32.mrb[0].mxu0
    %v266 = vadd.f32 %v133, %v265
    %v267 = vpop.f32.mrb[0].mxu0
    %v268 = vpop.f32.mrb[0].mxu0
    %v269 = vadd.f32 %v133, %v268
    %v270 = vpop.f32.mrb[0].mxu0
    %271 = vmatprep.mubr.bf16.mxu0 0
    %272 = vmatmul.mubr.bf16.gmra.mrb[0].mxu0 %v168
    %v273 = vpop.f32.mrb[0].mxu0
    %v274 = vadd.f32 %v133, %v273
    %v275 = vpop.f32.mrb[0].mxu0
    %v276 = vpop.f32.mrb[0].mxu0
    %v277 = vadd.f32 %v133, %v276
    %v278 = vpop.f32.mrb[0].mxu0
    %279 = vmatprep.mubr.bf16.mxu0 0
    %280 = vmatmul.mubr.bf16.gmra.mrb[0].mxu0 %v169
    %v281 = vpop.f32.mrb[0].mxu0
    %v282 = vadd.f32 %v133, %v281
    %v283 = vpop.f32.mrb[0].mxu0
    %v284 = vpop.f32.mrb[0].mxu0
    %v285 = vadd.f32 %v133, %v284
    %v286 = vpop.f32.mrb[0].mxu0
    %287 = vmatprep.mubr.bf16.mxu0 0
    %288 = vmatmul.mubr.bf16.gmra.mrb[0].mxu0 %v170
    %v289 = vpop.f32.mrb[0].mxu0
    %v290 = vadd.f32 %v133, %v289
    %v291 = vpop.f32.mrb[0].mxu0
    %v292 = vpop.f32.mrb[0].mxu0
    %v293 = vadd.f32 %v133, %v292
    %v294 = vpop.f32.mrb[0].mxu0
    %295 = vmatprep.mubr.bf16.mxu0 0
    %296 = vmatmul.mubr.bf16.gmra.mrb[0].mxu0 %v171
    %v297 = vpop.f32.mrb[0].mxu0
    %v298 = vadd.f32 %v133, %v297
    %v299 = vpop.f32.mrb[0].mxu0
    %v300 = vpop.f32.mrb[0].mxu0
    %v301 = vadd.f32 %v133, %v300
    %v302 = vpop.f32.mrb[0].mxu0
    %303 = vmatprep.mubr.bf16.mxu0 0
    %304 = vmatmul.mubr.bf16.gmra.mrb[0].mxu0 %v172
    %v305 = vpop.f32.mrb[0].mxu0
    %v306 = vadd.f32 %v133, %v305
    %v307 = vpop.f32.mrb[0].mxu0
    %v308 = vpop.f32.mrb[0].mxu0
    %v309 = vadd.f32 %v133, %v308
    %v310 = vpop.f32.mrb[0].mxu0
    %311 = vmatprep.mubr.bf16.mxu0 0
    %312 = vmatmul.mubr.bf16.gmra.mrb[0].mxu0 %v173
    %v313 = vpop.f32.mrb[0].mxu0
    %v314 = vadd.f32 %v133, %v313
    %v315 = vpop.f32.mrb[0].mxu0
    %v316 = vpop.f32.mrb[0].mxu0
    %v317 = vadd.f32 %v133, %v316
    %v318 = vpop.f32.mrb[0].mxu0
    %319 = vmatprep.mubr.bf16.mxu0 0
    %320 = vmatmul.mubr.bf16.gmra.mrb[0].mxu0 %v174
    %v321 = vpop.f32.mrb[0].mxu0
    %v322 = vadd.f32 %v133, %v321
    %v323 = vpop.f32.mrb[0].mxu0
    %v324 = vpop.f32.mrb[0].mxu0
    %v325 = vadd.f32 %v133, %v324
    %v326 = vpop.f32.mrb[0].mxu0
    %327 = vdwg.mxu0
    %v328 = vpack.c.bf16 %v269, %v266
    %v329 = vpack.c.bf16 %v277, %v274
    %v330 = vpack.c.bf16 %v285, %v282
    %v331 = vpack.c.bf16 %v293, %v290
    %v332 = vpack.c.bf16 %v301, %v298
    %v333 = vpack.c.bf16 %v309, %v306
    %v334 = vpack.c.bf16 %v317, %v314
    %v335 = vpack.c.bf16 %v325, %v322
    %v352 = vunpack.c.l.b16 %v80
    %v353 = vunpack.c.l.b16 %v81
    %v354 = vunpack.c.l.b16 %v82
    %v355 = vunpack.c.l.b16 %v83
    %v356 = vunpack.c.l.b16 %v84
    %v357 = vunpack.c.l.b16 %v85
    %v358 = vunpack.c.l.b16 %v86
    %v359 = vunpack.c.l.b16 %v87
    %v360 = vunpack.c.l.b16 %v88
    %v361 = vunpack.c.l.b16 %v89
    %v362 = vunpack.c.l.b16 %v90
    %v363 = vunpack.c.l.b16 %v91
    %v364 = vunpack.c.l.b16 %v92
    %v365 = vunpack.c.l.b16 %v93
    %v366 = vunpack.c.l.b16 %v94
    %v367 = vunpack.c.l.b16 %v95
    %v368 = vpack.c.b16 %v353, %v352
    %v369 = vpack.c.b16 %v355, %v354
    %v370 = vpack.c.b16 %v357, %v356
    %v371 = vpack.c.b16 %v359, %v358
    %v372 = vpack.c.b16 %v361, %v360
    %v373 = vpack.c.b16 %v363, %v362
    %v374 = vpack.c.b16 %v365, %v364
    %v375 = vpack.c.b16 %v367, %v366
    %384 = vmatprep.subr.bf16.mxu0 0
    %385 = vmatpush1.bf16.msra.mxu0 %v328
    %386 = vmatprep.subr.bf16.mxu0 0
    %387 = vmatpush1.bf16.msra.mxu0 %v329
    %388 = vmatprep.subr.bf16.mxu0 0
    %389 = vmatpush1.bf16.msra.mxu0 %v330
    %390 = vmatprep.subr.bf16.mxu0 0
    %391 = vmatpush1.bf16.msra.mxu0 %v331
    %392 = vmatprep.subr.bf16.mxu0 0
    %393 = vmatpush1.bf16.msra.mxu0 %v332
    %394 = vmatprep.subr.bf16.mxu0 0
    %395 = vmatpush1.bf16.msra.mxu0 %v333
    %396 = vmatprep.subr.bf16.mxu0 0
    %397 = vmatpush1.bf16.msra.mxu0 %v334
    %398 = vmatprep.subr.bf16.mxu0 0
    %399 = vmatpush1.bf16.msra.mxu0 %v335
    %400 = vmatprep.subr.bf16.mxu0 0
    %401 = vmatpush1.bf16.msra.mxu0 0
    %402 = vmatprep.subr.bf16.mxu0 0
    %403 = vmatpush1.bf16.msra.mxu0 0
    %404 = vmatprep.subr.bf16.mxu0 0
    %405 = vmatpush1.bf16.msra.mxu0 0
    %406 = vmatprep.subr.bf16.mxu0 0
    %407 = vmatpush1.bf16.msra.mxu0 0
    %408 = vmatprep.subr.bf16.mxu0 0
    %409 = vmatpush1.bf16.msra.mxu0 0
    %410 = vmatprep.subr.bf16.mxu0 0
    %411 = vmatpush1.bf16.msra.mxu0 0
    %412 = vmatprep.subr.bf16.mxu0 0
    %413 = vmatpush1.bf16.msra.mxu0 0
    %414 = vmatprep.subr.bf16.mxu0 0
    %415 = vmatpush1.bf16.msra.mxu0 0
    %416 = vmatprep.mubr.bf16.mxu0 0
    %417 = vmatmul.mubr.bf16.gmra.mrb[0].mxu0 %v368
    %v418 = vpop.f32.mrb[0].mxu0
    %v419 = vadd.f32 0.0, %v418
    %v420 = vpop.f32.mrb[0].mxu0
    %v421 = vpop.f32.mrb[0].mxu0
    %v422 = vadd.f32 0.0, %v421
    %v423 = vpop.f32.mrb[0].mxu0
    %424 = vmatprep.mubr.bf16.mxu0 0
    %425 = vmatmul.mubr.bf16.gmra.mrb[0].mxu0 %v369
    %v426 = vpop.f32.mrb[0].mxu0
    %v427 = vadd.f32 0.0, %v426
    %v428 = vpop.f32.mrb[0].mxu0
    %v429 = vpop.f32.mrb[0].mxu0
    %v430 = vadd.f32 0.0, %v429
    %v431 = vpop.f32.mrb[0].mxu0
    %432 = vmatprep.mubr.bf16.mxu0 0
    %433 = vmatmul.mubr.bf16.gmra.mrb[0].mxu0 %v370
    %v434 = vpop.f32.mrb[0].mxu0
    %v435 = vadd.f32 0.0, %v434
    %v436 = vpop.f32.mrb[0].mxu0
    %v437 = vpop.f32.mrb[0].mxu0
    %v438 = vadd.f32 0.0, %v437
    %v439 = vpop.f32.mrb[0].mxu0
    %440 = vmatprep.mubr.bf16.mxu0 0
    %441 = vmatmul.mubr.bf16.gmra.mrb[0].mxu0 %v371
    %v442 = vpop.f32.mrb[0].mxu0
    %v443 = vadd.f32 0.0, %v442
    %v444 = vpop.f32.mrb[0].mxu0
    %v445 = vpop.f32.mrb[0].mxu0
    %v446 = vadd.f32 0.0, %v445
    %v447 = vpop.f32.mrb[0].mxu0
    %448 = vmatprep.mubr.bf16.mxu0 0
    %449 = vmatmul.mubr.bf16.gmra.mrb[0].mxu0 %v372
    %v450 = vpop.f32.mrb[0].mxu0
    %v451 = vadd.f32 0.0, %v450
    %v452 = vpop.f32.mrb[0].mxu0
    %v453 = vpop.f32.mrb[0].mxu0
    %v454 = vadd.f32 0.0, %v453
    %v455 = vpop.f32.mrb[0].mxu0
    %456 = vmatprep.mubr.bf16.mxu0 0
    %457 = vmatmul.mubr.bf16.gmra.mrb[0].mxu0 %v373
    %v458 = vpop.f32.mrb[0].mxu0
    %v459 = vadd.f32 0.0, %v458
    %v460 = vpop.f32.mrb[0].mxu0
    %v461 = vpop.f32.mrb[0].mxu0
    %v462 = vadd.f32 0.0, %v461
    %v463 = vpop.f32.mrb[0].mxu0
    %464 = vmatprep.mubr.bf16.mxu0 0
    %465 = vmatmul.mubr.bf16.gmra.mrb[0].mxu0 %v374
    %v466 = vpop.f32.mrb[0].mxu0
    %v467 = vadd.f32 0.0, %v466
    %v468 = vpop.f32.mrb[0].mxu0
    %v469 = vpop.f32.mrb[0].mxu0
    %v470 = vadd.f32 0.0, %v469
    %v471 = vpop.f32.mrb[0].mxu0
    %472 = vmatprep.mubr.bf16.mxu0 0
    %473 = vmatmul.mubr.bf16.gmra.mrb[0].mxu0 %v375
    %v474 = vpop.f32.mrb[0].mxu0
    %v475 = vadd.f32 0.0, %v474
    %v476 = vpop.f32.mrb[0].mxu0
    %v477 = vpop.f32.mrb[0].mxu0
    %v478 = vadd.f32 0.0, %v477
    %v479 = vpop.f32.mrb[0].mxu0
    %480 = vdwg.mxu0
    %v481 = vmax.f32 %v419, 0.0
    %v482 = vmax.f32 %v422, 0.0
    %v483 = vmax.f32 %v427, 0.0
    %v484 = vmax.f32 %v430, 0.0
    %v485 = vmax.f32 %v435, 0.0
    %v486 = vmax.f32 %v438, 0.0
    %v487 = vmax.f32 %v443, 0.0
    %v488 = vmax.f32 %v446, 0.0
    %v489 = vmax.f32 %v451, 0.0
    %v490 = vmax.f32 %v454, 0.0
    %v491 = vmax.f32 %v459, 0.0
    %v492 = vmax.f32 %v462, 0.0
    %v493 = vmax.f32 %v467, 0.0
    %v494 = vmax.f32 %v470, 0.0
    %v495 = vmax.f32 %v475, 0.0
    %v496 = vmax.f32 %v478, 0.0
    %v497 = vpack.c.bf16 %v482, %v481
    %v498 = vpack.c.bf16 %v484, %v483
    %v499 = vpack.c.bf16 %v486, %v485
    %v500 = vpack.c.bf16 %v488, %v487
    %v501 = vpack.c.bf16 %v490, %v489
    %v502 = vpack.c.bf16 %v492, %v491
    %v503 = vpack.c.bf16 %v494, %v493
    %v504 = vpack.c.bf16 %v496, %v495
    %v505 = vld [vmem:[#allocation8] sm:$0xf]
    %v506 = vld [vmem:[#allocation8 + $0x4] sm:$0xf]
    %v507 = vld [vmem:[#allocation8 + $0x8] sm:$0xf]
    %v508 = vld [vmem:[#allocation8 + $0xc] sm:$0xf]
    %v509 = vld [vmem:[#allocation8 + $0x10] sm:$0xf]
    %v510 = vld [vmem:[#allocation8 + $0x14] sm:$0xf]
    %v511 = vld [vmem:[#allocation8 + $0x18] sm:$0xf]
    %v512 = vld [vmem:[#allocation8 + $0x1c] sm:$0xf]
    %v513 = vld [vmem:[#allocation8 + $0x20] sm:$0xf]
    %v514 = vld [vmem:[#allocation8 + $0x24] sm:$0xf]
    %v515 = vld [vmem:[#allocation8 + $0x28] sm:$0xf]
    %v516 = vld [vmem:[#allocation8 + $0x2c] sm:$0xf]
    %v517 = vld [vmem:[#allocation8 + $0x30] sm:$0xf]
    %v518 = vld [vmem:[#allocation8 + $0x34] sm:$0xf]
    %v519 = vld [vmem:[#allocation8 + $0x38] sm:$0xf]
    %v520 = vld [vmem:[#allocation8 + $0x3c] sm:$0xf]
    %v521 = vld [vmem:[%s5] sm:$0x1]
    %v523 = vlaneseq
    %v524 = vshrl.u32 %v523, 7
    %v525 = vsub.s32 0, %v524
    %v526 = vrot.slane %v521, %v525
    %v544 = vunpack.c.l.b16 %v505
    %v545 = vunpack.c.l.b16 %v506
    %v546 = vunpack.c.l.b16 %v507
    %v547 = vunpack.c.l.b16 %v508
    %v548 = vunpack.c.l.b16 %v509
    %v549 = vunpack.c.l.b16 %v510
    %v550 = vunpack.c.l.b16 %v511
    %v551 = vunpack.c.l.b16 %v512
    %v552 = vunpack.c.l.b16 %v513
    %v553 = vunpack.c.l.b16 %v514
    %v554 = vunpack.c.l.b16 %v515
    %v555 = vunpack.c.l.b16 %v516
    %v556 = vunpack.c.l.b16 %v517
    %v557 = vunpack.c.l.b16 %v518
    %v558 = vunpack.c.l.b16 %v519
    %v559 = vunpack.c.l.b16 %v520
    %v560 = vpack.c.b16 %v545, %v544
    %v561 = vpack.c.b16 %v547, %v546
    %v562 = vpack.c.b16 %v549, %v548
    %v563 = vpack.c.b16 %v551, %v550
    %v564 = vpack.c.b16 %v553, %v552
    %v565 = vpack.c.b16 %v555, %v554
    %v566 = vpack.c.b16 %v557, %v556
    %v567 = vpack.c.b16 %v559, %v558
    %576 = vmatprep.subr.bf16.mxu0 0
    %577 = vmatpush1.bf16.msra.mxu0 %v560
    %578 = vmatprep.subr.bf16.mxu0 0
    %579 = vmatpush1.bf16.msra.mxu0 %v561
    %580 = vmatprep.subr.bf16.mxu0 0
    %581 = vmatpush1.bf16.msra.mxu0 %v562
    %582 = vmatprep.subr.bf16.mxu0 0
    %583 = vmatpush1.bf16.msra.mxu0 %v563
    %584 = vmatprep.subr.bf16.mxu0 0
    %585 = vmatpush1.bf16.msra.mxu0 %v564
    %586 = vmatprep.subr.bf16.mxu0 0
    %587 = vmatpush1.bf16.msra.mxu0 %v565
    %588 = vmatprep.subr.bf16.mxu0 0
    %589 = vmatpush1.bf16.msra.mxu0 %v566
    %590 = vmatprep.subr.bf16.mxu0 0
    %591 = vmatpush1.bf16.msra.mxu0 %v567
    %592 = vmatprep.subr.bf16.mxu0 0
    %593 = vmatpush1.bf16.msra.mxu0 0
    %594 = vmatprep.subr.bf16.mxu0 0
    %595 = vmatpush1.bf16.msra.mxu0 0
    %596 = vmatprep.subr.bf16.mxu0 0
    %597 = vmatpush1.bf16.msra.mxu0 0
    %598 = vmatprep.subr.bf16.mxu0 0
    %599 = vmatpush1.bf16.msra.mxu0 0
    %600 = vmatprep.subr.bf16.mxu0 0
    %601 = vmatpush1.bf16.msra.mxu0 0
    %602 = vmatprep.subr.bf16.mxu0 0
    %603 = vmatpush1.bf16.msra.mxu0 0
    %604 = vmatprep.subr.bf16.mxu0 0
    %605 = vmatpush1.bf16.msra.mxu0 0
    %606 = vmatprep.subr.bf16.mxu0 0
    %607 = vmatpush1.bf16.msra.mxu0 0
    %608 = vmatprep.mubr.bf16.mxu0 0
    %609 = vmatmul.mubr.bf16.gmra.mrb[0].mxu0 %v497
    %v610 = vpop.f32.mrb[0].mxu0
    %v611 = vadd.f32 %v526, %v610
    %v612 = vpop.f32.mrb[0].mxu0
    %v613 = vpop.f32.mrb[0].mxu0
    %v614 = vadd.f32 %v526, %v613
    %v615 = vpop.f32.mrb[0].mxu0
    %616 = vmatprep.mubr.bf16.mxu0 0
    %617 = vmatmul.mubr.bf16.gmra.mrb[0].mxu0 %v498
    %v618 = vpop.f32.mrb[0].mxu0
    %v619 = vadd.f32 %v526, %v618
    %v620 = vpop.f32.mrb[0].mxu0
    %v621 = vpop.f32.mrb[0].mxu0
    %v622 = vadd.f32 %v526, %v621
    %v623 = vpop.f32.mrb[0].mxu0
    %624 = vmatprep.mubr.bf16.mxu0 0
    %625 = vmatmul.mubr.bf16.gmra.mrb[0].mxu0 %v499
    %v626 = vpop.f32.mrb[0].mxu0
    %v627 = vadd.f32 %v526, %v626
    %v628 = vpop.f32.mrb[0].mxu0
    %v629 = vpop.f32.mrb[0].mxu0
    %v630 = vadd.f32 %v526, %v629
    %v631 = vpop.f32.mrb[0].mxu0
    %632 = vmatprep.mubr.bf16.mxu0 0
    %633 = vmatmul.mubr.bf16.gmra.mrb[0].mxu0 %v500
    %v634 = vpop.f32.mrb[0].mxu0
    %v635 = vadd.f32 %v526, %v634
    %v636 = vpop.f32.mrb[0].mxu0
    %v637 = vpop.f32.mrb[0].mxu0
    %v638 = vadd.f32 %v526, %v637
    %v639 = vpop.f32.mrb[0].mxu0
    %640 = vmatprep.mubr.bf16.mxu0 0
    %641 = vmatmul.mubr.bf16.gmra.mrb[0].mxu0 %v501
    %v642 = vpop.f32.mrb[0].mxu0
    %v643 = vadd.f32 %v526, %v642
    %v644 = vpop.f32.mrb[0].mxu0
    %v645 = vpop.f32.mrb[0].mxu0
    %v646 = vadd.f32 %v526, %v645
    %v647 = vpop.f32.mrb[0].mxu0
    %648 = vmatprep.mubr.bf16.mxu0 0
    %649 = vmatmul.mubr.bf16.gmra.mrb[0].mxu0 %v502
    %v650 = vpop.f32.mrb[0].mxu0
    %v651 = vadd.f32 %v526, %v650
    %v652 = vpop.f32.mrb[0].mxu0
    %v653 = vpop.f32.mrb[0].mxu0
    %v654 = vadd.f32 %v526, %v653
    %v655 = vpop.f32.mrb[0].mxu0
    %656 = vmatprep.mubr.bf16.mxu0 0
    %657 = vmatmul.mubr.bf16.gmra.mrb[0].mxu0 %v503
    %v658 = vpop.f32.mrb[0].mxu0
    %v659 = vadd.f32 %v526, %v658
    %v660 = vpop.f32.mrb[0].mxu0
    %v661 = vpop.f32.mrb[0].mxu0
    %v662 = vadd.f32 %v526, %v661
    %v663 = vpop.f32.mrb[0].mxu0
    %664 = vmatprep.mubr.bf16.mxu0 0
    %665 = vmatmul.mubr.bf16.gmra.mrb[0].mxu0 %v504
    %v666 = vpop.f32.mrb[0].mxu0
    %v667 = vadd.f32 %v526, %v666
    %v668 = vpop.f32.mrb[0].mxu0
    %v669 = vpop.f32.mrb[0].mxu0
    %v670 = vadd.f32 %v526, %v669
    %v671 = vpop.f32.mrb[0].mxu0
    %672 = vdwg.mxu0
    %v673 = vpack.c.bf16 %v614, %v611
    %v674 = vpack.c.bf16 %v622, %v619
    %v675 = vpack.c.bf16 %v630, %v627
    %v676 = vpack.c.bf16 %v638, %v635
    %v677 = vpack.c.bf16 %v646, %v643
    %v678 = vpack.c.bf16 %v654, %v651
    %v679 = vpack.c.bf16 %v662, %v659
    %v680 = vpack.c.bf16 %v670, %v667
    %681 = vmatprep.subr.bf16.mxu0 0
    %682 = vmatpush1.bf16.msra.mxu0 %v673
    %683 = vmatprep.subr.bf16.mxu0 0
    %684 = vmatpush1.bf16.msra.mxu0 %v674
    %685 = vmatprep.subr.bf16.mxu0 0
    %686 = vmatpush1.bf16.msra.mxu0 %v675
    %687 = vmatprep.subr.bf16.mxu0 0
    %688 = vmatpush1.bf16.msra.mxu0 %v676
    %689 = vmatprep.subr.bf16.mxu0 0
    %690 = vmatpush1.bf16.msra.mxu0 %v677
    %691 = vmatprep.subr.bf16.mxu0 0
    %692 = vmatpush1.bf16.msra.mxu0 %v678
    %693 = vmatprep.subr.bf16.mxu0 0
    %694 = vmatpush1.bf16.msra.mxu0 %v679
    %695 = vmatprep.subr.bf16.mxu0 0
    %696 = vmatpush1.bf16.msra.mxu0 %v680
    %697 = vmatprep.subr.bf16.mxu0 0
    %698 = vmatpush1.bf16.msra.mxu0 0
    %699 = vmatprep.subr.bf16.mxu0 0
    %700 = vmatpush1.bf16.msra.mxu0 0
    %701 = vmatprep.subr.bf16.mxu0 0
    %702 = vmatpush1.bf16.msra.mxu0 0
    %703 = vmatprep.subr.bf16.mxu0 0
    %704 = vmatpush1.bf16.msra.mxu0 0
    %705 = vmatprep.subr.bf16.mxu0 0
    %706 = vmatpush1.bf16.msra.mxu0 0
    %707 = vmatprep.subr.bf16.mxu0 0
    %708 = vmatpush1.bf16.msra.mxu0 0
    %709 = vmatprep.subr.bf16.mxu0 0
    %710 = vmatpush1.bf16.msra.mxu0 0
    %711 = vmatprep.subr.bf16.mxu0 0
    %712 = vmatpush1.bf16.msra.mxu0 0
    %713 = vmatprep.mubr.bf16.mxu0 0
    %714 = vmatmul.mubr.bf16.gmra.mrb[0].mxu0 %v368
    %v715 = vpop.f32.mrb[0].mxu0
    %v716 = vadd.f32 0.0, %v715
    %v717 = vpop.f32.mrb[0].mxu0
    %v718 = vpop.f32.mrb[0].mxu0
    %v719 = vadd.f32 0.0, %v718
    %v720 = vpop.f32.mrb[0].mxu0
    %721 = vmatprep.mubr.bf16.mxu0 0
    %722 = vmatmul.mubr.bf16.gmra.mrb[0].mxu0 %v369
    %v723 = vpop.f32.mrb[0].mxu0
    %v724 = vadd.f32 0.0, %v723
    %v725 = vpop.f32.mrb[0].mxu0
    %v726 = vpop.f32.mrb[0].mxu0
    %v727 = vadd.f32 0.0, %v726
    %v728 = vpop.f32.mrb[0].mxu0
    %729 = vmatprep.mubr.bf16.mxu0 0
    %730 = vmatmul.mubr.bf16.gmra.mrb[0].mxu0 %v370
    %v731 = vpop.f32.mrb[0].mxu0
    %v732 = vadd.f32 0.0, %v731
    %v733 = vpop.f32.mrb[0].mxu0
    %v734 = vpop.f32.mrb[0].mxu0
    %v735 = vadd.f32 0.0, %v734
    %v736 = vpop.f32.mrb[0].mxu0
    %737 = vmatprep.mubr.bf16.mxu0 0
    %738 = vmatmul.mubr.bf16.gmra.mrb[0].mxu0 %v371
    %v739 = vpop.f32.mrb[0].mxu0
    %v740 = vadd.f32 0.0, %v739
    %v741 = vpop.f32.mrb[0].mxu0
    %v742 = vpop.f32.mrb[0].mxu0
    %v743 = vadd.f32 0.0, %v742
    %v744 = vpop.f32.mrb[0].mxu0
    %745 = vmatprep.mubr.bf16.mxu0 0
    %746 = vmatmul.mubr.bf16.gmra.mrb[0].mxu0 %v372
    %v747 = vpop.f32.mrb[0].mxu0
    %v748 = vadd.f32 0.0, %v747
    %v749 = vpop.f32.mrb[0].mxu0
    %v750 = vpop.f32.mrb[0].mxu0
    %v751 = vadd.f32 0.0, %v750
    %v752 = vpop.f32.mrb[0].mxu0
    %753 = vmatprep.mubr.bf16.mxu0 0
    %754 = vmatmul.mubr.bf16.gmra.mrb[0].mxu0 %v373
    %v755 = vpop.f32.mrb[0].mxu0
    %v756 = vadd.f32 0.0, %v755
    %v757 = vpop.f32.mrb[0].mxu0
    %v758 = vpop.f32.mrb[0].mxu0
    %v759 = vadd.f32 0.0, %v758
    %v760 = vpop.f32.mrb[0].mxu0
    %761 = vmatprep.mubr.bf16.mxu0 0
    %762 = vmatmul.mubr.bf16.gmra.mrb[0].mxu0 %v374
    %v763 = vpop.f32.mrb[0].mxu0
    %v764 = vadd.f32 0.0, %v763
    %v765 = vpop.f32.mrb[0].mxu0
    %v766 = vpop.f32.mrb[0].mxu0
    %v767 = vadd.f32 0.0, %v766
    %v768 = vpop.f32.mrb[0].mxu0
    %769 = vmatprep.mubr.bf16.mxu0 0
    %770 = vmatmul.mubr.bf16.gmra.mrb[0].mxu0 %v375
    %v771 = vpop.f32.mrb[0].mxu0
    %v772 = vadd.f32 0.0, %v771
    %v773 = vpop.f32.mrb[0].mxu0
    %v774 = vpop.f32.mrb[0].mxu0
    %v775 = vadd.f32 0.0, %v774
    %v776 = vpop.f32.mrb[0].mxu0
    %777 = vdwg.mxu0
    %778 = vst [vmem:[#allocation10] sm:$0xff] %v716
    %779 = vst [vmem:[#allocation10 + $0x8] sm:$0xff] %v719
    %780 = vst [vmem:[#allocation10 + $0x10] sm:$0xff] %v724
    %781 = vst [vmem:[#allocation10 + $0x18] sm:$0xff] %v727
    %782 = vst [vmem:[#allocation10 + $0x20] sm:$0xff] %v732
    %783 = vst [vmem:[#allocation10 + $0x28] sm:$0xff] %v735
    %784 = vst [vmem:[#allocation10 + $0x30] sm:$0xff] %v740
    %785 = vst [vmem:[#allocation10 + $0x38] sm:$0xff] %v743
    %786 = vst [vmem:[#allocation10 + $0x40] sm:$0xff] %v748
    %787 = vst [vmem:[#allocation10 + $0x48] sm:$0xff] %v751
    %788 = vst [vmem:[#allocation10 + $0x50] sm:$0xff] %v756
    %789 = vst [vmem:[#allocation10 + $0x58] sm:$0xff] %v759
    %790 = vst [vmem:[#allocation10 + $0x60] sm:$0xff] %v764
    %791 = vst [vmem:[#allocation10 + $0x68] sm:$0xff] %v767
    %792 = vst [vmem:[#allocation10 + $0x70] sm:$0xff] %v772
    %793 = vst [vmem:[#allocation10 + $0x78] sm:$0xff] %v775
    // Predicated region
    $region42: #{tpu_custom_call.1} parent=1 // pred_check
      _
    $region43: #{tpu_custom_call.1} parent=1 // pred_check_branch
      %795 = sbr.rel (0) target = $region45
    $region44: #{tpu_custom_call.1} parent=1 // pred_region
      %s797 = ssub.s32 2048, 2048
      %798 = vsyncadd [#allocation4], %s797
      %s799 = sshll.u32 [#allocation10], 4
      %s800 = int_to_ptr.vmem [resolvable:$true] %s799
      %805 = dma.vmem_to_hbm [thread:$0]  %s800, 2048, %s6, [#allocation4], 128, 128, 8
    $region45: #{tpu_custom_call.1} parent=1 // pred_fallthru
      _
    // Predicated region
    $region46: #{tpu_custom_call.1} parent=1 // pred_check
      _
    $region47: #{tpu_custom_call.1} parent=1 // pred_check_branch
      %807 = sbr.rel (0) target = $region49
    $region48: #{tpu_custom_call.1} parent=1 // pred_region
      %808 = dma.done [#allocation4], 2048
    $region49: #{tpu_custom_call.1} parent=1 // pred_fallthru
      _
    %809 = vsyncpa [#allocation3], 1
    %810 = vsyncpa [#allocation6], 1
    %811 = vsyncpa [#allocation9], 1
    %812 = vsyncpa [#allocation4], 1

</llo_original>
